<compile_context>
chip_gen: v7x
topology: tpu7x:2x2x1
jax: 0.10.0
libtpu: 0.0.40
codegen_flags: <defaults>
</compile_context>

<pallas_src>
import jax
import jax.numpy as jnp
from jax import lax
from jax.experimental import pallas as pl
from jax.experimental.pallas import tpu as pltpu


_EPS = 1e-12          # ATen cosine_embedding_loss epsilon (added to squared norms)
_OUT_SUBLANES = 8     # each parallel chunk writes an (8, 128) partial-sum slab
_OUT_LANES = 128
_VMEM_LIMIT_BYTES = 32 * 1024 * 1024
_INPUT_TILE_BUDGET = 16 * 1024 * 1024   # 2 inputs x 2 (double-buffer) x tile bytes


def _cdiv(a, b):
    return -(-a // b)


def _choose_tile_rows(n, d, itemsize):
    """Largest sublane-aligned row tile that keeps double-buffered inputs in budget."""
    max_rows = _INPUT_TILE_BUDGET // max(1, 4 * d * itemsize)
    tn = int(min(1024, max_rows))
    tn = max(8, (tn // 8) * 8)
    if n <= tn:
        return n            # single tile spans all rows (block == full array dim)
    return tn


def _make_kernel(n_rows, tile_rows, tiles_per_chunk):
    """Bake static shape info (true N, tile size, steps per chunk) into the body."""

    def kernel(e1_ref, e2_ref, y_ref, out_ref, acc_ref):
        p = pl.program_id(0)            # parallel chunk (megacore split on v7x)
        t = pl.program_id(1)            # reduction step within the chunk

        @pl.when(t == 0)
        def _init():
            acc_ref[...] = jnp.zeros_like(acc_ref)

        e1 = e1_ref[...]                # (TILE_ROWS, D), input dtype
        e2 = e2_ref[...]
        y = y_ref[...]                  # (TILE_ROWS, 1) float32, +1 / -1

        # Row-wise reductions along the lane axis; accumulate in f32 even for
        # bf16 inputs (no full-tile f32 copy is materialized).
        dot = jnp.sum(e1 * e2, axis=-1, keepdims=True, dtype=jnp.float32)
        n1 = jnp.sum(e1 * e1, axis=-1, keepdims=True, dtype=jnp.float32)
        n2 = jnp.sum(e2 * e2, axis=-1, keepdims=True, dtype=jnp.float32)

        eps = jnp.float32(_EPS)
        # sqrt + divide fused into a single EUP rsqrt (its own VLIW slot).
        cos = dot * lax.rsqrt((n1 + eps) * (n2 + eps))

        # margin = 0 (default): y==1 -> 1 - cos ; y==-1 -> max(0, cos)
        per_sample = jnp.where(y > 0, 1.0 - cos, jnp.maximum(cos, 0.0))

        # Mask rows past the true N (ragged tail tile / phantom tiles when the
        # tile count does not divide evenly across parallel chunks).
        tile_idx = p * tiles_per_chunk + t
        row = tile_idx * tile_rows + lax.broadcasted_iota(
            jnp.int32, per_sample.shape, 0)
        per_sample = jnp.where(row < n_rows, per_sample, jnp.float32(0.0))

        # Elementwise accumulate; defer the cross-sublane reduce to the epilogue.
        acc_ref[...] += per_sample

        @pl.when(t == pl.num_programs(1) - 1)
        def _finalize():
            total = jnp.sum(acc_ref[...])
            # Lane-dense (8, 128) store of the chunk's partial sum.
            out_ref[...] = jnp.broadcast_to(total, out_ref.shape).astype(
                out_ref.dtype)

    return kernel


def cosine_embedding_loss(embedding1, embedding2, similarlabel, log_sigma,
                          *, tile_rows=None):
    """embedding1/2: [N, D]; similarlabel: [N] of +1/-1; log_sigma: [1]."""
    n, d = embedding1.shape
    itemsize = jnp.dtype(embedding1.dtype).itemsize

    if tile_rows is None:
        tn = _choose_tile_rows(n, d, itemsize)
    else:
        tn = min(int(tile_rows), n)
        if tn < n:
            tn = max(8, (tn // 8) * 8)   # keep sublane alignment unless full-span

    num_tiles = _cdiv(n, tn)
    num_chunks = 2 if num_tiles >= 2 else 1          # megacore split on v7x
    steps_per_chunk = _cdiv(num_tiles, num_chunks)

    y2d = similarlabel.astype(jnp.float32).reshape(n, 1)

    def row_map(p, t):
        return (p * steps_per_chunk + t, 0)

    cost = pl.CostEstimate(
        flops=8 * n * d,
        transcendentals=2 * n,
        bytes_accessed=2 * n * d * itemsize + n * 4
        + num_chunks * _OUT_SUBLANES * _OUT_LANES * 4,
    )

    partials = pl.pallas_call(
        _make_kernel(n, tn, steps_per_chunk),
        out_shape=jax.ShapeDtypeStruct(
            (num_chunks * _OUT_SUBLANES, _OUT_LANES), jnp.float32),
        grid_spec=pltpu.PrefetchScalarGridSpec(
            num_scalar_prefetch=0,
            grid=(num_chunks, steps_per_chunk),
            in_specs=[
                pl.BlockSpec((tn, d), row_map),      # embedding1
                pl.BlockSpec((tn, d), row_map),      # embedding2
                pl.BlockSpec((tn, 1), row_map),      # labels
            ],
            out_specs=pl.BlockSpec(
                (_OUT_SUBLANES, _OUT_LANES), lambda p, t: (p, 0)),
            scratch_shapes=[pltpu.VMEM((tn, 1), jnp.float32)],
        ),
        compiler_params=pltpu.CompilerParams(
            dimension_semantics=("parallel", "arbitrary"),
            vmem_limit_bytes=_VMEM_LIMIT_BYTES,
        ),
        cost_estimate=cost,
    )(embedding1, embedding2, y2d)

    # Per-chunk partial sums live at element [chunk*8, 0] (value is replicated
    # across each (8, 128) slab). Combine + tiny scalar epilogue in the wrapper.
    chunk_sums = partials.reshape(num_chunks, _OUT_SUBLANES, _OUT_LANES)[:, 0, 0]
    mean_loss = jnp.sum(chunk_sums) / jnp.float32(n)

    ls = jnp.asarray(log_sigma, jnp.float32).reshape(-1)[0]
    squared_sigma = jnp.exp(2.0 * ls)                 # exp(log_sigma)**2
    return mean_loss / squared_sigma + squared_sigma


def _reference(e1, e2, y, log_sigma):
    eps = _EPS
    dot = jnp.sum(e1 * e2, axis=-1)
    n1 = jnp.sum(e1 * e1, axis=-1) + eps
    n2 = jnp.sum(e2 * e2, axis=-1) + eps
    cos = dot / jnp.sqrt(n1 * n2)
    per = jnp.where(y > 0, 1.0 - cos, jnp.maximum(cos, 0.0))
    loss = jnp.mean(per)
    s2 = jnp.exp(log_sigma.reshape(-1)[0]) ** 2
    return loss / s2 + s2


if __name__ == "__main__":
    key = jax.random.PRNGKey(0)

    # --- Test 1: small shapes matching the module's forward (single tile) ---
    k1, k2, k3, key = (*jax.random.split(key, 3), key)
    N, D = 8, 32
    e1 = jax.random.normal(k1, (N, D), dtype=jnp.float32)
    e2 = jax.random.normal(k2, (N, D), dtype=jnp.float32)
    y = jax.random.bernoulli(k3, 0.5, (N,)).astype(jnp.float32) * 2.0 - 1.0
    log_sigma = jnp.zeros((1,), dtype=jnp.float32)   # nn.Parameter(torch.zeros(1))

    out = cosine_embedding_loss(e1, e2, y, log_sigma)
    jax.block_until_ready(out)
    ref = _reference(e1, e2, y, log_sigma)
    assert jnp.allclose(out, ref, atol=1e-5, rtol=1e-4), (out, ref)

    # --- Test 2: multi-tile + 2 parallel chunks + ragged tail masking ---
    k4, k5, k6 = jax.random.split(key, 3)
    N2, D2 = 1000, 256                              # 8 tiles of 128 rows, ragged tail
    e1b = jax.random.normal(k4, (N2, D2), dtype=jnp.float32)
    e2b = jax.random.normal(k5, (N2, D2), dtype=jnp.float32)
    yb = jax.random.bernoulli(k6, 0.5, (N2,)).astype(jnp.float32) * 2.0 - 1.0
    log_sigma_b = jnp.full((1,), 0.3, dtype=jnp.float32)

    out_b = cosine_embedding_loss(e1b, e2b, yb, log_sigma_b, tile_rows=128)
    jax.block_until_ready(out_b)
    ref_b = _reference(e1b, e2b, yb, log_sigma_b)
    assert jnp.allclose(out_b, ref_b, atol=1e-5, rtol=1e-4), (out_b, ref_b)

    print("KERNEL_OK")
</pallas_src>

<mosaic_0001>
module attributes {stable_mosaic.version = 11 : i64} {
  func.func @kernel(%arg0: i32, %arg1: i32, %arg2: memref<8x32xf32, #tpu.memory_space<vmem>>, %arg3: memref<8x32xf32, #tpu.memory_space<vmem>>, %arg4: memref<8x1xf32, #tpu.memory_space<vmem>>, %arg5: memref<8x128xf32, #tpu.memory_space<vmem>>, %arg6: memref<8x1xf32, #tpu.memory_space<vmem>>) attributes {dimension_semantics = [#tpu.dimension_semantics<parallel>, #tpu.dimension_semantics<arbitrary>], iteration_bounds = array<i64: 1, 1>, scalar_prefetch = 0 : i64, scratch_operands = 1 : i64, tpu.core_type = #tpu.core_type<tc>, window_params = [{transform_indices = @transform_0, window_bounds = array<i64: 8, 32>}, {transform_indices = @transform_1, window_bounds = array<i64: 8, 32>}, {transform_indices = @transform_2, window_bounds = array<i64: 8, 1>}, {transform_indices = @transform_3, window_bounds = array<i64: 8, 128>}]} {
    %c0_i32 = arith.constant 0 : i32
    %0 = arith.cmpi eq, %arg1, %c0_i32 : i32
    %1 = arith.extui %0 : i1 to i32
    %c0_i32_0 = arith.constant 0 : i32
    %2 = arith.cmpi ne, %1, %c0_i32_0 : i32
    scf.if %2 {
      %cst_21 = arith.constant 0.000000e+00 : f32
      %45 = vector.broadcast %cst_21 : f32 to vector<8x1xf32>
      %c0_22 = arith.constant 0 : index
      %c0_23 = arith.constant 0 : index
      %46 = vector.load %arg6[%c0_22, %c0_23] : memref<8x1xf32, #tpu.memory_space<vmem>>, vector<8x1xf32>
      tpu.vector_store %arg6[%c0_22, %c0_23], %45 {strides = array<i32>} : memref<8x1xf32, #tpu.memory_space<vmem>>, vector<8x1xf32>,
    } else {
    }
    %c0 = arith.constant 0 : index
    %c0_1 = arith.constant 0 : index
    %3 = vector.load %arg2[%c0, %c0_1] : memref<8x32xf32, #tpu.memory_space<vmem>>, vector<8x32xf32>
    %c0_2 = arith.constant 0 : index
    %c0_3 = arith.constant 0 : index
    %4 = vector.load %arg3[%c0_2, %c0_3] : memref<8x32xf32, #tpu.memory_space<vmem>>, vector<8x32xf32>
    %c0_4 = arith.constant 0 : index
    %c0_5 = arith.constant 0 : index
    %5 = vector.load %arg4[%c0_4, %c0_5] : memref<8x1xf32, #tpu.memory_space<vmem>>, vector<8x1xf32>
    %6 = arith.mulf %3, %4 : vector<8x32xf32>
    %cst = arith.constant dense<0.000000e+00> : vector<8xf32>
    %7 = vector.multi_reduction <add>, %6, %cst [1] : vector<8x32xf32> to vector<8xf32>
    %8 = vector.shape_cast %7 : vector<8xf32> to vector<8x1xf32>
    %9 = arith.mulf %3, %3 : vector<8x32xf32>
    %cst_6 = arith.constant dense<0.000000e+00> : vector<8xf32>
    %10 = vector.multi_reduction <add>, %9, %cst_6 [1] : vector<8x32xf32> to vector<8xf32>
    %11 = vector.shape_cast %10 : vector<8xf32> to vector<8x1xf32>
    %12 = arith.mulf %4, %4 : vector<8x32xf32>
    %cst_7 = arith.constant dense<0.000000e+00> : vector<8xf32>
    %13 = vector.multi_reduction <add>, %12, %cst_7 [1] : vector<8x32xf32> to vector<8xf32>
    %14 = vector.shape_cast %13 : vector<8xf32> to vector<8x1xf32>
    %cst_8 = arith.constant 9.99999996E-13 : f32
    %15 = vector.broadcast %cst_8 : f32 to vector<8x1xf32>
    %16 = arith.addf %11, %15 : vector<8x1xf32>
    %cst_9 = arith.constant 9.99999996E-13 : f32
    %17 = vector.broadcast %cst_9 : f32 to vector<8x1xf32>
    %18 = arith.addf %14, %17 : vector<8x1xf32>
    %19 = arith.mulf %16, %18 : vector<8x1xf32>
    %20 = math.rsqrt %19 : vector<8x1xf32>
    %21 = arith.mulf %8, %20 : vector<8x1xf32>
    %cst_10 = arith.constant 0.000000e+00 : f32
    %22 = vector.broadcast %cst_10 : f32 to vector<8x1xf32>
    %23 = arith.cmpf ogt, %5, %22 : vector<8x1xf32>
    %cst_11 = arith.constant 1.000000e+00 : f32
    %24 = vector.broadcast %cst_11 : f32 to vector<8x1xf32>
    %25 = arith.subf %24, %21 : vector<8x1xf32>
    %cst_12 = arith.constant 0.000000e+00 : f32
    %26 = vector.broadcast %cst_12 : f32 to vector<8x1xf32>
    %27 = arith.maximumf %21, %26 : vector<8x1xf32>
    %28 = arith.select %23, %25, %27 : vector<8x1xi1>, vector<8x1xf32>
    %c1_i32 = arith.constant 1 : i32
    %29 = arith.muli %arg0, %c1_i32 : i32
    %30 = arith.addi %29, %arg1 : i32
    %c8_i32 = arith.constant 8 : i32
    %31 = arith.muli %30, %c8_i32 : i32
    %32 = tpu.iota {dimensions = array<i32: 0>} : vector<8x1xi32>
    %33 = vector.broadcast %31 : i32 to vector<8x1xi32>
    %34 = arith.addi %33, %32 : vector<8x1xi32>
    %c8_i32_13 = arith.constant 8 : i32
    %35 = vector.broadcast %c8_i32_13 : i32 to vector<8x1xi32>
    %36 = arith.cmpi slt, %34, %35 : vector<8x1xi32>
    %cst_14 = arith.constant 0.000000e+00 : f32
    %37 = vector.broadcast %cst_14 : f32 to vector<8x1xf32>
    %38 = arith.select %36, %28, %37 : vector<8x1xi1>, vector<8x1xf32>
    %c0_15 = arith.constant 0 : index
    %c0_16 = arith.constant 0 : index
    %39 = vector.load %arg6[%c0_15, %c0_16] : memref<8x1xf32, #tpu.memory_space<vmem>>, vector<8x1xf32>
    %40 = arith.addf %39, %38 : vector<8x1xf32>
    %c0_17 = arith.constant 0 : index
    %c0_18 = arith.constant 0 : index
    %41 = vector.load %arg6[%c0_17, %c0_18] : memref<8x1xf32, #tpu.memory_space<vmem>>, vector<8x1xf32>
    tpu.vector_store %arg6[%c0_17, %c0_18], %40 {strides = array<i32>} : memref<8x1xf32, #tpu.memory_space<vmem>>, vector<8x1xf32>,
    %c0_i32_19 = arith.constant 0 : i32
    %42 = arith.cmpi eq, %arg1, %c0_i32_19 : i32
    %43 = arith.extui %42 : i1 to i32
    %c0_i32_20 = arith.constant 0 : i32
    %44 = arith.cmpi ne, %43, %c0_i32_20 : i32
    scf.if %44 {
      %c0_21 = arith.constant 0 : index
      %c0_22 = arith.constant 0 : index
      %45 = vector.load %arg6[%c0_21, %c0_22] : memref<8x1xf32, #tpu.memory_space<vmem>>, vector<8x1xf32>
      %46 = vector.shape_cast %45 : vector<8x1xf32> to vector<1x8x1xf32>
      %cst_23 = arith.constant dense<0.000000e+00> : vector<1xf32>
      %47 = vector.multi_reduction <add>, %46, %cst_23 [1, 2] : vector<1x8x1xf32> to vector<1xf32>
      %48 = vector.shape_cast %47 : vector<1xf32> to vector<1x1x1xf32>
      %49 = vector.extract %48[0, 0, 0] : f32 from vector<1x1x1xf32>
      %50 = vector.broadcast %49 : f32 to vector<8x128xf32>
      %c0_24 = arith.constant 0 : index
      %c0_25 = arith.constant 0 : index
      %51 = vector.load %arg5[%c0_24, %c0_25] : memref<8x128xf32, #tpu.memory_space<vmem>>, vector<8x128xf32>
      tpu.vector_store %arg5[%c0_24, %c0_25], %50 {strides = array<i32>} : memref<8x128xf32, #tpu.memory_space<vmem>>, vector<8x128xf32>,
    } else {
    }
    return
  }
  func.func @transform_0(%arg0: i32, %arg1: i32) -> (i32, i32) {
    %c1_i32 = arith.constant 1 : i32
    %0 = arith.muli %arg0, %c1_i32 : i32
    %1 = arith.addi %0, %arg1 : i32
    %c0_i32 = arith.constant 0 : i32
    %c0_i32_0 = arith.constant 0 : i32
    return %1, %c0_i32 : i32, i32
  }
  func.func @transform_1(%arg0: i32, %arg1: i32) -> (i32, i32) {
    %c1_i32 = arith.constant 1 : i32
    %0 = arith.muli %arg0, %c1_i32 : i32
    %1 = arith.addi %0, %arg1 : i32
    %c0_i32 = arith.constant 0 : i32
    %c0_i32_0 = arith.constant 0 : i32
    return %1, %c0_i32 : i32, i32
  }
  func.func @transform_2(%arg0: i32, %arg1: i32) -> (i32, i32) {
    %c1_i32 = arith.constant 1 : i32
    %0 = arith.muli %arg0, %c1_i32 : i32
    %1 = arith.addi %0, %arg1 : i32
    %c0_i32 = arith.constant 0 : i32
    %c0_i32_0 = arith.constant 0 : i32
    return %1, %c0_i32 : i32, i32
  }
  func.func @transform_3(%arg0: i32, %arg1: i32) -> (i32, i32) {
    %c0_i32 = arith.constant 0 : i32
    %c0_i32_0 = arith.constant 0 : i32
    return %arg0, %c0_i32 : i32, i32
  }
}

</mosaic_0001>

<llo_original>
// kernel: tpu_custom_call.1
$region0: #{tpu_custom_call.1}
  #allocation0 [shape = 'u32[]', space=smem, size = 0x4, offset = 0x4, fixed_abs, tag = 'smem constant byte address 0x4 - core index']
  #allocation1 [shape = 'u32[144,128]{1,0:T(1,128)}', space=vmem, size = 0x12000, scoped, tag = 'internal scratch']
  #allocation2 [shape = 'f32[8,1]{1,0:T(8,128)}', space=vmem, size = 0x1000, scoped, tag = 'scratch operand']
  %s0 = inlined_call_operand.vmem [shape: f32[8,32], index: 0, kind: input, shape index: {}]
  %s1 = inlined_call_operand.hbm [shape: f32[8,32], index: 1, kind: input, shape index: {}]
  %s2 = inlined_call_operand.vmem [shape: f32[8,1], index: 2, kind: input, shape index: {}]
  %s3 = inlined_call_operand.hbm [shape: f32[8,128], index: 3, kind: output, shape index: {}]
  %s4 = sld [smem:[#allocation0]]
  $region34: #{tpu_custom_call.1} parent=0
    _
  %s6 = ssub.s32 1, %s4
  %s7 = scalar_select 0, %s6, %s4
  $region1: #{tpu_custom_call.1} parent=0
    #allocation3 [shape = 'u8[4096]{0}', space=vmem, size = 0x1000, scoped, tag = 'input window, operand 1, single buffered']
    #allocation4 [shape = 's32[1]{0}', space=sflag, size = 0x4, scoped, tag = 'scoped memory for tpu_custom_call.1']
    #allocation5 [shape = 's32[1]{0}', space=sflag, size = 0x4, scoped, tag = 'scoped memory for tpu_custom_call.1']
    #allocation6 [shape = 'u8[4096]{0}', space=vmem, size = 0x1000, scoped, tag = 'output window, operand 0, single buffered']
    %8 = vsyncpa [#allocation4], 0
    %9 = vsyncpa [#allocation5], 0
    // Predicated region
    $region2: #{tpu_custom_call.1} parent=1 // pred_check
      _
    $region3: #{tpu_custom_call.1} parent=1 // pred_check_branch
      %11 = sbr.rel (0) target = $region5
    $region4: #{tpu_custom_call.1} parent=1 // pred_region
      %s12 = sadd.s32 0, 0
      %p13 = scmp.lt.s32.totalorder %s12, 0
      %s14 = scalar_select %p13, %s12, 0
      %s15 = smul.addr %s14, 8
      %s16 = scalar_lea.vmem %s0, %s15
      %s17 = sadd.s32 0, 0
    $region5: #{tpu_custom_call.1} parent=1 // pred_fallthru
      _
    // Predicated region
    $region6: #{tpu_custom_call.1} parent=1 // pred_check
      _
    $region7: #{tpu_custom_call.1} parent=1 // pred_check_branch
      %19 = sbr.rel (0) target = $region9
    $region8: #{tpu_custom_call.1} parent=1 // pred_region
      %s20 = sadd.s32 0, 0
      %s22 = ssub.s32 128, 128
      %23 = vsyncadd [#allocation4], %s22
      %s24 = smul.addr %s20, 128
      %s25 = scalar_lea.hbm %s1, %s24
      %s27 = sshll.u32 [#allocation3], 4
      %s28 = int_to_ptr.vmem [resolvable:$true] %s27
      %30 = dma.hbm_to_vmem [thread:$0]  %s25, 128, %s28, [#allocation4]
    $region9: #{tpu_custom_call.1} parent=1 // pred_fallthru
      _
    // Predicated region
    $region10: #{tpu_custom_call.1} parent=1 // pred_check
      _
    $region11: #{tpu_custom_call.1} parent=1 // pred_check_branch
      %32 = sbr.rel (0) target = $region13
    $region12: #{tpu_custom_call.1} parent=1 // pred_region
      %s33 = sadd.s32 0, 0
      %p34 = scmp.lt.s32.totalorder %s33, 0
      %s35 = scalar_select %p34, %s33, 0
      %s36 = smul.addr %s35, 8
      %s37 = scalar_lea.vmem %s2, %s36
      %s38 = sadd.s32 0, 0
    $region13: #{tpu_custom_call.1} parent=1 // pred_fallthru
      _
    // Predicated region
    $region14: #{tpu_custom_call.1} parent=1 // pred_check
      _
    $region15: #{tpu_custom_call.1} parent=1 // pred_check_branch
      %40 = sbr.rel (0) target = $region17
    $region16: #{tpu_custom_call.1} parent=1 // pred_region
      %41 = dma.done [#allocation4], 128
    $region17: #{tpu_custom_call.1} parent=1 // pred_fallthru
      _
    %s42 = sadd.s32 0, 0
    %p43 = scmp.lt.s32.totalorder %s42, 0
    %s44 = scalar_select %p43, %s42, 0
    %s45 = smul.addr %s44, 8
    %s46 = scalar_lea.vmem %s0, %s45
    %s47 = sadd.s32 0, 0
    %p48 = scmp.lt.s32.totalorder %s47, 0
    %s49 = scalar_select %p48, %s47, 0
    %s50 = smul.addr %s49, 8
    %s51 = scalar_lea.vmem %s2, %s50
    %s52 = sadd.s32 0, 0
    %p53 = scmp.lt.s32.totalorder %s52, 0
    %s54 = scalar_select %p53, %s52, 0
    %s55 = smul.addr %s54, 8
    %s56 = scalar_lea.vmem %s0, %s55
    %s57 = sadd.s32 0, 0
    %s58 = sadd.s32 0, 0
    %s59 = sadd.s32 0, 0
    %p60 = scmp.lt.s32.totalorder %s59, 0
    %s61 = scalar_select %p60, %s59, 0
    %s62 = smul.addr %s61, 8
    %s63 = scalar_lea.vmem %s2, %s62
    %s64 = sadd.s32 0, 0
    %p65 = scmp.eq.s32.totalorder 0, 0
    // Predicated region
    $region18: #{tpu_custom_call.1} parent=1 // pred_check
      %p66 = pneg %p65
    $region19: #{tpu_custom_call.1} parent=1 // pred_check_branch
      %68 = sbr.rel (%p66) target = $region21
    $region20: #{tpu_custom_call.1} parent=1 // pred_region
      %vm69 = vcmask 7168
      %70 = vst.msk [vmem:[#allocation2] sm:$0xff] %vm69, 0.0
    $region21: #{tpu_custom_call.1} parent=1 // pred_fallthru
      _
    %v71 = vld [vmem:[%s56] sm:$0xff]
    %v72 = vld [vmem:[#allocation3] sm:$0xff]
    %v73 = vld [vmem:[%s63] sm:$0xff]
    %v74 = vmul.f32 %v71, %v72
    %vm75 = vcmask 261120
    %v76 = vsel %vm75, %v74, 0.0
    %77 = vadd.xlane.f32.xlu0 %v76
    %v78 = vpop.xlane.xlu0 %77
    %v79 = vmul.f32 %v71, %v71
    %v80 = vsel %vm75, %v79, 0.0
    %81 = vadd.xlane.f32.xlu0 %v80
    %v82 = vpop.xlane.xlu0 %81
    %v83 = vmul.f32 %v72, %v72
    %v84 = vsel %vm75, %v83, 0.0
    %85 = vadd.xlane.f32.xlu0 %v84
    %v86 = vpop.xlane.xlu0 %85
    %v87 = vadd.f32 %v82, 1e-12
    %v88 = vadd.f32 %v86, 1e-12
    %v89 = vmul.f32 %v87, %v88
    %v90 = vrsqrt.pop %v89
    %v91 = vmul.f32 %v78, %v90
    %vm92 = vcmp.gt.f32.partialorder %v73, 0.0
    %v93 = vsub.f32 1.0, %v91
    %v94 = vmax.f32 %v91, 0.0
    %v95 = vsel %vm92, %v93, %v94
    %s96 = sadd.s32 0, 0
    %s97 = smul.u32 %s96, 8
    %v98 = vlaneseq
    %v99 = vshrl.u32 %v98, 7
    %v100 = vstv %s97
    %v101 = vadd.s32 %v100, %v99
    %vm102 = vcmp.lt.s32.totalorder %v101, 8
    %v103 = vsel %vm102, %v95, 0.0
    %v104 = vld [vmem:[#allocation2] sm:$0xff]
    %v105 = vadd.f32 %v104, %v103
    %vm106 = vcmask 7168
    %107 = vst.msk [vmem:[#allocation2] sm:$0xff] %vm106, %v105
    // Predicated region
    $region22: #{tpu_custom_call.1} parent=1 // pred_check
      %p108 = pneg %p65
    $region23: #{tpu_custom_call.1} parent=1 // pred_check_branch
      %110 = sbr.rel (%p108) target = $region25
    $region24: #{tpu_custom_call.1} parent=1 // pred_region
      %v111 = vld [vmem:[#allocation2] sm:$0xff]
      %v112 = vsel %vm106, %v111, 0.0
      %113 = vadd.xlane.f32.xlu0 %v112
      %v114 = vpop.xlane.xlu0 %113
      %v115 = vrot.slane %v114, 4
      %v116 = vadd.f32 %v114, %v115
      %v117 = vrot.slane %v116, 2
      %v118 = vadd.f32 %v116, %v117
      %v119 = vrot.slane %v118, 1
      %v120 = vadd.f32 %v118, %v119
      %s121 = vtos %v120
      %v122 = vstv %s121
      %123 = vst [vmem:[#allocation6] sm:$0xff] %v122
    $region25: #{tpu_custom_call.1} parent=1 // pred_fallthru
      _
    // Predicated region
    $region26: #{tpu_custom_call.1} parent=1 // pred_check
      _
    $region27: #{tpu_custom_call.1} parent=1 // pred_check_branch
      %125 = sbr.rel (0) target = $region29
    $region28: #{tpu_custom_call.1} parent=1 // pred_region
      %s127 = ssub.s32 128, 128
      %128 = vsyncadd [#allocation5], %s127
      %s130 = sshll.u32 [#allocation6], 4
      %s131 = int_to_ptr.vmem [resolvable:$true] %s130
      %133 = dma.vmem_to_hbm [thread:$0]  %s131, 128, %s3, [#allocation5]
    $region29: #{tpu_custom_call.1} parent=1 // pred_fallthru
      _
    // Predicated region
    $region30: #{tpu_custom_call.1} parent=1 // pred_check
      _
    $region31: #{tpu_custom_call.1} parent=1 // pred_check_branch
      %135 = sbr.rel (0) target = $region33
    $region32: #{tpu_custom_call.1} parent=1 // pred_region
      %136 = dma.done [#allocation5], 128
    $region33: #{tpu_custom_call.1} parent=1 // pred_fallthru
      _
    %137 = vsyncpa [#allocation4], 1
    %138 = vsyncpa [#allocation5], 1

</llo_original>
